<compile_context>
chip_gen: v6e
topology: v6e:2x2x1
jax: 0.10.0
libtpu: 0.0.40
codegen_flags: <defaults>
</compile_context>

<pallas_src>
import math

import jax
import jax.numpy as jnp
from jax.experimental import pallas as pl
from jax.experimental.pallas import tpu as pltpu

LANES = 128                      # vreg lane width; last dim of the slab
TARGET_BLOCK_BYTES = 2 << 20     # ~2 MiB per block: ~86% of HBM roofline, fits
                                 # default scoped VMEM on v5e/v6e/v7x


def _round_up(x, m):
    return ((x + m - 1) // m) * m


def _make_kernel(k1, k2, k3):
    """Build an elementwise kernel with k1/k2/k3 folded in as constants."""
    k1 = float(k1)
    k2 = float(k2)
    k3 = float(k3)

    if k1 > 0.0:
        # sigmoid(k3*x - k2 - log(k1)) via a single tanh (one EUP push/elem).
        a = k3
        b = -(k2 + math.log(k1))

        def kernel(x_ref, o_ref):
            z = a * x_ref[...].astype(jnp.float32) + b
            o_ref[...] = (0.5 * (jnp.tanh(0.5 * z) + 1.0)).astype(o_ref.dtype)

    else:
        # k1 <= 0: log(k1) undefined, keep the literal formula (mirrors torch,
        # including possible inf/NaN when the denominator crosses zero).
        def kernel(x_ref, o_ref):
            x = x_ref[...].astype(jnp.float32)
            denom = 1.0 + k1 * jnp.exp(k2 - k3 * x)
            o_ref[...] = pl.reciprocal(denom, approx=False).astype(o_ref.dtype)

    return kernel


def _choose_row_tile(rows, itemsize):
    """Pick a dtype-aware block height (multiple of the sublane packing)."""
    # Sublane packing: 8 rows for 4-byte, 16 for 2-byte, 32 for 1-byte dtypes.
    sublane = max(8, 32 // max(1, itemsize))
    # ~2 MiB per block, rounded down to the sublane packing.
    max_rows = max(sublane,
                   (TARGET_BLOCK_BYTES // (LANES * itemsize)) // sublane * sublane)
    # Keep >= ~4 grid steps when the array allows it, so in/out DMAs pipeline
    # and v7x's two TensorCores both get work.
    quarter = _round_up(pl.cdiv(rows, 4), sublane)
    return min(max_rows, quarter)


def sigmoid_scaling(l2, k1, k2, k3):
    """Elementwise parameterized sigmoid, computed in a Pallas TPU kernel.

    k1, k2, k3 are Python scalars (module attributes in the PyTorch spec) and
    are baked into the kernel at trace time.
    """
    orig_shape = l2.shape
    dtype = l2.dtype
    itemsize = jnp.dtype(dtype).itemsize

    x = l2.reshape(-1)
    n = x.shape[0]

    # Slow path only when the flat size isn't lane-aligned: pad by <=127
    # elements (wrapper-side copy; callers wanting peak throughput should pass
    # sizes that are multiples of 128).
    ragged = (n % LANES) != 0
    n_pad = _round_up(n, LANES)
    if ragged:
        x = jnp.pad(x, (0, n_pad - n))

    rows = n_pad // LANES
    x2d = x.reshape(rows, LANES)

    row_tile = _choose_row_tile(rows, itemsize)
    grid = (pl.cdiv(rows, row_tile),)   # partial last block handled by masking

    kernel = _make_kernel(k1, k2, k3)

    out2d = pl.pallas_call(
        kernel,
        out_shape=jax.ShapeDtypeStruct((rows, LANES), dtype),
        grid=grid,
        in_specs=[pl.BlockSpec((row_tile, LANES), lambda i: (i, 0))],
        out_specs=pl.BlockSpec((row_tile, LANES), lambda i: (i, 0)),
        compiler_params=pltpu.CompilerParams(
            dimension_semantics=("parallel",),
        ),
    )(x2d)

    out = out2d.reshape(-1)
    if ragged:
        out = out[:n]
    return out.reshape(orig_shape)


def _reference(x, k1, k2, k3):
    # Mirrors the PyTorch forward exactly (in f32).
    xf = x.astype(jnp.float32)
    return (1.0 / (1.0 + k1 * jnp.exp(k2 - k3 * xf))).astype(x.dtype)


if __name__ == "__main__":
    key = jax.random.PRNGKey(0)
    k1, k2, k3 = 2.0, 0.5, 1.5

    # Small NCHW-shaped input consistent with the module being applied to a
    # conv/capsule activation map.  Flat size 2048 -> lane-aligned fast path,
    # grid of 2 parallel steps.
    x = jax.random.normal(key, (2, 4, 16, 16), dtype=jnp.float32)
    out = jax.block_until_ready(sigmoid_scaling(x, k1, k2, k3))
    ref = _reference(x, k1, k2, k3)
    assert out.shape == x.shape and out.dtype == x.dtype
    assert jnp.allclose(out, ref, atol=1e-6, rtol=1e-5)

    # Ragged (non-lane-aligned) input exercises the <=127-element pad path and
    # the masked partial last block.
    x2 = jax.random.normal(jax.random.PRNGKey(1), (3, 5, 7, 11), dtype=jnp.float32)
    out2 = jax.block_until_ready(sigmoid_scaling(x2, k1, k2, k3))
    ref2 = _reference(x2, k1, k2, k3)
    assert out2.shape == x2.shape and out2.dtype == x2.dtype
    assert jnp.allclose(out2, ref2, atol=1e-6, rtol=1e-5)

    # bf16 path (dtype-aware sublane/row-tile selection).
    x3 = jax.random.normal(jax.random.PRNGKey(2), (2, 8, 32, 32), dtype=jnp.bfloat16)
    out3 = jax.block_until_ready(sigmoid_scaling(x3, k1, k2, k3))
    ref3 = _reference(x3, k1, k2, k3)
    assert out3.shape == x3.shape and out3.dtype == x3.dtype
    assert jnp.allclose(out3.astype(jnp.float32), ref3.astype(jnp.float32),
                        atol=1e-2, rtol=1e-2)

    print("KERNEL_OK")
</pallas_src>

<mosaic_0001>
module attributes {stable_mosaic.version = 11 : i64} {
  func.func @kernel(%arg0: i32, %arg1: memref<8x128xf32, #tpu.memory_space<vmem>>, %arg2: memref<8x128xf32, #tpu.memory_space<vmem>>) attributes {dimension_semantics = [#tpu.dimension_semantics<parallel>], iteration_bounds = array<i64: 2>, scalar_prefetch = 0 : i64, scratch_operands = 0 : i64, tpu.core_type = #tpu.core_type<tc>, window_params = [{transform_indices = @transform_0, window_bounds = array<i64: 8, 128>}, {transform_indices = @transform_1, window_bounds = array<i64: 8, 128>}]} {
    %c0 = arith.constant 0 : index
    %c0_0 = arith.constant 0 : index
    %0 = vector.load %arg1[%c0, %c0_0] : memref<8x128xf32, #tpu.memory_space<vmem>>, vector<8x128xf32>
    %cst = arith.constant 1.500000e+00 : f32
    %1 = vector.broadcast %cst : f32 to vector<8x128xf32>
    %2 = arith.mulf %1, %0 : vector<8x128xf32>
    %cst_1 = arith.constant -1.19314718 : f32
    %3 = vector.broadcast %cst_1 : f32 to vector<8x128xf32>
    %4 = arith.addf %2, %3 : vector<8x128xf32>
    %cst_2 = arith.constant 5.000000e-01 : f32
    %5 = vector.broadcast %cst_2 : f32 to vector<8x128xf32>
    %6 = arith.mulf %5, %4 : vector<8x128xf32>
    %7 = math.tanh %6 : vector<8x128xf32>
    %cst_3 = arith.constant 1.000000e+00 : f32
    %8 = vector.broadcast %cst_3 : f32 to vector<8x128xf32>
    %9 = arith.addf %7, %8 : vector<8x128xf32>
    %cst_4 = arith.constant 5.000000e-01 : f32
    %10 = vector.broadcast %cst_4 : f32 to vector<8x128xf32>
    %11 = arith.mulf %10, %9 : vector<8x128xf32>
    %c0_5 = arith.constant 0 : index
    %c0_6 = arith.constant 0 : index
    %12 = vector.load %arg2[%c0_5, %c0_6] : memref<8x128xf32, #tpu.memory_space<vmem>>, vector<8x128xf32>
    tpu.vector_store %arg2[%c0_5, %c0_6], %11 {strides = array<i32>} : memref<8x128xf32, #tpu.memory_space<vmem>>, vector<8x128xf32>,
    return
  }
  func.func @transform_0(%arg0: i32) -> (i32, i32) {
    %c0_i32 = arith.constant 0 : i32
    %c0_i32_0 = arith.constant 0 : i32
    return %arg0, %c0_i32 : i32, i32
  }
  func.func @transform_1(%arg0: i32) -> (i32, i32) {
    %c0_i32 = arith.constant 0 : i32
    %c0_i32_0 = arith.constant 0 : i32
    return %arg0, %c0_i32 : i32, i32
  }
}

</mosaic_0001>

<llo_original>
// kernel: tpu_custom_call.1
$region0: #{tpu_custom_call.1}
  #allocation0 [shape = 'u32[]', space=smem, size = 0x4, offset = 0x4, fixed_abs, tag = 'smem constant byte address 0x4 - core index']
  #allocation1 [shape = 'u32[144,128]{1,0:T(1,128)}', space=vmem, size = 0x12000, scoped, tag = 'internal scratch']
  %s0 = inlined_call_operand.hbm [shape: f32[16,128], index: 0, kind: input, shape index: {}]
  %s1 = inlined_call_operand.hbm [shape: f32[16,128], index: 1, kind: output, shape index: {}]
  %s2 = sld [smem:[#allocation0]]
  $region41: #{tpu_custom_call.1} parent=0
    _
  %s4 = ssub.s32 1, %s2
  %s5 = scalar_select 0, %s4, %s2
  $region1: #{tpu_custom_call.1} parent=0
    #allocation2 [shape = 'u8[8192]{0}', space=vmem, size = 0x2000, scoped, tag = 'input window, operand 0']
    #allocation3 [shape = 's32[2]{0}', space=sflag, size = 0x8, scoped, tag = 'scoped memory for tpu_custom_call.1']
    #allocation4 [shape = 's32[2]{0}', space=sflag, size = 0x8, scoped, tag = 'scoped memory for tpu_custom_call.1']
    #allocation5 [shape = 'u8[8192]{0}', space=vmem, size = 0x2000, scoped, tag = 'output window, operand 0']
    %6 = vsyncpa [#allocation3], 0
    %s7 = scalar_lea.sflag [#allocation3], 1
    %8 = vsyncpa %s7, 0
    %9 = vsyncpa [#allocation4], 0
    %s10 = scalar_lea.sflag [#allocation4], 1
    %11 = vsyncpa %s10, 0
    loop: start=0, step=1, limit=4
    $region2: #{tpu_custom_call.1} parent=1 // loop_pre_header
      _
    $region3: #{tpu_custom_call.1} parent=1 // loop_header
      %s13 = sphi 0, %s17
      %p14 = scmp.ge.s32.totalorder %s13, 4
      %s23 = sphi 0, %s25
      %s26 = sphi 0, %s23
      %s27 = sphi 0, %s26
      %s43 = sphi 0, %s27
      %s49 = sphi 0, %s51
      %s52 = sphi 0, %s49
      %s53 = sphi 0, %s52
      %s69 = sphi 0, %s53
    $region4: #{tpu_custom_call.1} parent=1 // loop_header_branch
      %16 = sbr.rel (%p14) target = $region8
    $region5: #{tpu_custom_call.1} parent=1 // loop_body
      %s18 = ssub.s32 %s13, 1
      %s19 = ssub.s32 %s13, 2
      %s20 = sadd.s32 %s13, 1
      %s21 = ssub.s32 %s13, %s20
      %p22 = scmp.eq.s32.totalorder %s21, 0
      %s24 = sadd.s32 %s23, 1
      %s25 = scalar_select %p22, %s23, %s24
      %p28 = pneg %p22
      %p29 = scmp.eq.s32.totalorder %s13, 1
      %p30 = por %p28, %p29
      %p31 = scmp.ne.s32.totalorder %s23, %s26
      %p32 = scmp.eq.s32.totalorder %s13, 0
      %p33 = por %p31, %p32
      %p34 = scmp.ne.s32.totalorder %s23, %s26
      %p35 = scmp.eq.s32.totalorder %s18, 1
      %p36 = por %p34, %p35
      %p37 = scmp.ne.s32.totalorder %s26, %s27
      %p38 = scmp.eq.s32.totalorder %s18, 0
      %p39 = por %p37, %p38
      %p40 = scmp.ne.s32.totalorder %s26, %s27
      %p41 = scmp.eq.s32.totalorder %s19, 1
      %p42 = por %p40, %p41
      %p44 = scmp.ne.s32.totalorder %s27, %s43
      %p45 = scmp.eq.s32.totalorder %s19, 0
      %p46 = por %p44, %p45
      %s47 = ssub.s32 %s13, %s20
      %p48 = scmp.eq.s32.totalorder %s47, 0
      %s50 = sadd.s32 %s49, 1
      %s51 = scalar_select %p48, %s49, %s50
      %p54 = pneg %p48
      %p55 = scmp.eq.s32.totalorder %s13, 1
      %p56 = por %p54, %p55
      %p57 = scmp.ne.s32.totalorder %s49, %s52
      %p58 = scmp.eq.s32.totalorder %s13, 0
      %p59 = por %p57, %p58
      %p60 = scmp.ne.s32.totalorder %s49, %s52
      %p61 = scmp.eq.s32.totalorder %s18, 1
      %p62 = por %p60, %p61
      %p63 = scmp.ne.s32.totalorder %s52, %s53
      %p64 = scmp.eq.s32.totalorder %s18, 0
      %p65 = por %p63, %p64
      %p66 = scmp.ne.s32.totalorder %s52, %s53
      %p67 = scmp.eq.s32.totalorder %s19, 1
      %p68 = por %p66, %p67
      %p70 = scmp.ne.s32.totalorder %s53, %s69
      %p71 = scmp.eq.s32.totalorder %s19, 0
      %p72 = por %p70, %p71
      %p73 = scmp.le.s32.totalorder 1, %s13
      %p74 = scmp.lt.s32.totalorder %s13, 3
      %p75 = pnand %p73, %p74
      %p76 = pneg %p75
      // Predicated region
      $region9: #{tpu_custom_call.1} parent=5 // pred_check
        _
      $region10: #{tpu_custom_call.1} parent=5 // pred_check_branch
        %78 = sbr.rel (%p75) target = $region12
      $region11: #{tpu_custom_call.1} parent=5 // pred_region
        %s79 = ssub.s32 %s13, 1
      $region12: #{tpu_custom_call.1} parent=5 // pred_fallthru
        _
      %p80 = scmp.lt.s32.totalorder %s13, 2
      // Predicated region
      $region13: #{tpu_custom_call.1} parent=5 // pred_check
        %p81 = pneg %p80
      $region14: #{tpu_custom_call.1} parent=5 // pred_check_branch
        %83 = sbr.rel (%p81) target = $region16
      $region15: #{tpu_custom_call.1} parent=5 // pred_region
        // Predicated region
        $region17: #{tpu_custom_call.1} parent=15 // pred_check
          %p84 = pneg %p33
        $region18: #{tpu_custom_call.1} parent=15 // pred_check_branch
          %86 = sbr.rel (%p84) target = $region20
        $region19: #{tpu_custom_call.1} parent=15 // pred_region
          %s87 = sand.u32 %s23, 1
          %s88 = scalar_lea.sflag [#allocation3], %s87
          %s89 = sand.u32 %s23, 1
          %s90 = smul.addr %s89, 8
          %s91 = scalar_lea.vmem [#allocation2], %s90
          %s93 = ssub.s32 128, 128
          %94 = vsyncadd %s88, %s93
          %s95 = smul.addr %s13, 128
          %s96 = scalar_lea.hbm %s0, %s95
          %s98 = sshll.u32 %s91, 4
          %s99 = int_to_ptr.vmem [resolvable:$true] %s98
          %101 = dma.hbm_to_vmem [thread:$0]  %s96, 128, %s99, %s88
        $region20: #{tpu_custom_call.1} parent=15 // pred_fallthru
          _
      $region16: #{tpu_custom_call.1} parent=5 // pred_fallthru
        _
      %p102 = scmp.le.s32.totalorder 1, %s13
      %p103 = scmp.lt.s32.totalorder %s13, 3
      %p104 = pnand %p102, %p103
      %p105 = pneg %p104
      // Predicated region
      $region21: #{tpu_custom_call.1} parent=5 // pred_check
        _
      $region22: #{tpu_custom_call.1} parent=5 // pred_check_branch
        %107 = sbr.rel (%p104) target = $region24
      $region23: #{tpu_custom_call.1} parent=5 // pred_region
        %s108 = ssub.s32 %s13, 1
        %s109 = sand.u32 %s26, 1
        %s110 = scalar_lea.sflag [#allocation3], %s109
        %s111 = sand.u32 %s26, 1
        %s112 = smul.addr %s111, 8
        %s113 = scalar_lea.vmem [#allocation2], %s112
        // Predicated region
        $region25: #{tpu_custom_call.1} parent=23 // pred_check
          %p114 = pneg %p39
        $region26: #{tpu_custom_call.1} parent=23 // pred_check_branch
          %116 = sbr.rel (%p114) target = $region28
        $region27: #{tpu_custom_call.1} parent=23 // pred_region
          %117 = dma.done %s110, 128
        $region28: #{tpu_custom_call.1} parent=23 // pred_fallthru
          _
        %s118 = sand.u32 %s26, 1
        %s119 = scalar_lea.sflag [#allocation3], %s118
        %s120 = sand.u32 %s26, 1
        %s121 = smul.addr %s120, 8
        %s122 = scalar_lea.vmem [#allocation2], %s121
        %p123 = pneg %p39
        %p124 = pneg %p36
        %p125 = pneg %p65
        %p126 = pneg %p62
        %s127 = sand.u32 %s52, 1
        %s128 = scalar_lea.sflag [#allocation4], %s127
        %s129 = sand.u32 %s52, 1
        %s130 = smul.addr %s129, 8
        %s131 = scalar_lea.vmem [#allocation5], %s130
        %v132 = vld [vmem:[%s113] sm:$0xff]
        %v133 = vmul.f32 %v132, 1.5
        %v134 = vadd.f32 %v133, -1.1931472
        %v135 = vmul.f32 %v134, 0.5
        %v136 = vtanh.pop %v135
        %v137 = vadd.f32 %v136, 1.0
        %v138 = vmul.f32 %v137, 0.5
        %139 = vst [vmem:[%s131] sm:$0xff] %v138
        %s140 = sand.u32 %s52, 1
        %s141 = scalar_lea.sflag [#allocation4], %s140
        %s142 = sand.u32 %s52, 1
        %s143 = smul.addr %s142, 8
        %s144 = scalar_lea.vmem [#allocation5], %s143
        // Predicated region
        $region29: #{tpu_custom_call.1} parent=23 // pred_check
          %p145 = pneg %p62
        $region30: #{tpu_custom_call.1} parent=23 // pred_check_branch
          %147 = sbr.rel (%p145) target = $region32
        $region31: #{tpu_custom_call.1} parent=23 // pred_region
          %s149 = ssub.s32 128, 128
          %150 = vsyncadd %s141, %s149
          %s151 = smul.addr %s18, 128
          %s152 = scalar_lea.hbm %s1, %s151
          %s154 = sshll.u32 %s144, 4
          %s155 = int_to_ptr.vmem [resolvable:$true] %s154
          %157 = dma.vmem_to_hbm [thread:$0]  %s155, 128, %s152, %s141
        $region32: #{tpu_custom_call.1} parent=23 // pred_fallthru
          _
      $region24: #{tpu_custom_call.1} parent=5 // pred_fallthru
        _
      %p158 = scmp.le.s32.totalorder 2, %s13
      // Predicated region
      $region33: #{tpu_custom_call.1} parent=5 // pred_check
        %p159 = pneg %p158
      $region34: #{tpu_custom_call.1} parent=5 // pred_check_branch
        %161 = sbr.rel (%p159) target = $region36
      $region35: #{tpu_custom_call.1} parent=5 // pred_region
        %s162 = ssub.s32 %s13, 2
        // Predicated region
        $region37: #{tpu_custom_call.1} parent=35 // pred_check
          %p163 = pneg %p68
        $region38: #{tpu_custom_call.1} parent=35 // pred_check_branch
          %165 = sbr.rel (%p163) target = $region40
        $region39: #{tpu_custom_call.1} parent=35 // pred_region
          %s166 = sand.u32 %s53, 1
          %s167 = scalar_lea.sflag [#allocation4], %s166
          %s168 = sand.u32 %s53, 1
          %s169 = smul.addr %s168, 8
          %s170 = scalar_lea.vmem [#allocation5], %s169
          %171 = dma.done %s167, 128
        $region40: #{tpu_custom_call.1} parent=35 // pred_fallthru
          _
      $region36: #{tpu_custom_call.1} parent=5 // pred_fallthru
        _
    $region6: #{tpu_custom_call.1} parent=1 // loop_footer
      %s17 = sadd.s32 1, %s13
    $region7: #{tpu_custom_call.1} parent=1 // loop_footer_branch
      %12 = sbr.rel target = $region3
    $region8: #{tpu_custom_call.1} parent=1 // loop_exit
      _
    %172 = vsyncpa [#allocation3], 1
    %s173 = scalar_lea.sflag [#allocation3], 1
    %174 = vsyncpa %s173, 1
    %175 = vsyncpa [#allocation4], 1
    %s176 = scalar_lea.sflag [#allocation4], 1
    %177 = vsyncpa %s176, 1

</llo_original>
